<compile_context>
chip_gen: v6e
topology: v6e:2x2x1
jax: 0.10.0
libtpu: 0.0.40
codegen_flags: <defaults>
</compile_context>

<pallas_src>
import functools

import jax
import jax.numpy as jnp
from jax.experimental import pallas as pl
from jax.experimental.pallas import tpu as pltpu


def _round_up(v, m):
    return (v + m - 1) // m * m


def se_mlp_kernel(x_ref, w1_ref, b_ref, w2_ref, o_ref):
    # x_ref : (Mp, Cin_p)            f32  activations (zero-padded rows/lanes)
    # w1_ref: (Cin_p, Cmid_p)        bf16 first 1x1 conv weight (pre-T/padded)
    # b_ref : (1, Cmid_p + Cin_p)    f32  [b1_padded | b2_padded]
    # w2_ref: (Cmid_p, Cin_p)        bf16 second 1x1 conv weight
    # o_ref : (Mp, Cin_p)            f32
    cmid_p = w1_ref.shape[1]
    x = x_ref[...].astype(jnp.bfloat16)
    h = jnp.dot(x, w1_ref[...], preferred_element_type=jnp.float32)
    h = h + b_ref[:, :cmid_p]                       # bias1 (f32, static slice)
    h = jnp.maximum(h, 0.0)                         # ReLU (f32)
    y = jnp.dot(h.astype(jnp.bfloat16), w2_ref[...],
                preferred_element_type=jnp.float32)
    y = y + b_ref[:, cmid_p:]                       # bias2 (f32, static slice)
    o_ref[...] = y                                  # lane-dense 896-wide store


def prepare_se_params(w1, b1, w2, b2):
    """One-time (init) layout prep: transpose torch weights, pad to (8,128)
    multiples, cast weights to bf16, concat biases (f32) into one buffer."""
    Cmid, Cin = w1.shape
    Cout = w2.shape[0]
    Cin_p = _round_up(Cin, 128)
    Cmid_p = _round_up(Cmid, 128)

    w1_p = jnp.zeros((Cin_p, Cmid_p), jnp.bfloat16).at[:Cin, :Cmid].set(
        w1.T.astype(jnp.bfloat16))
    w2_p = jnp.zeros((Cmid_p, Cin_p), jnp.bfloat16).at[:Cmid, :Cout].set(
        w2.T.astype(jnp.bfloat16))
    b1_p = jnp.zeros((1, Cmid_p), jnp.float32).at[:, :Cmid].set(b1[None, :])
    b2_p = jnp.zeros((1, Cin_p), jnp.float32).at[:, :Cout].set(b2[None, :])
    bias_cat = jnp.concatenate([b1_p, b2_p], axis=1)   # (1, Cmid_p + Cin_p)

    return {
        "w1_p": w1_p, "w2_p": w2_p, "bias_cat": bias_cat,
        "Cin": Cin, "Cmid": Cmid, "Cout": Cout,
        "Cin_p": Cin_p, "Cmid_p": Cmid_p,
    }


@functools.partial(jax.jit, static_argnames=("cin", "cmid", "cout"))
def _se_forward_2d(x2d, w1_p, bias_cat, w2_p, *, cin, cmid, cout):
    """x2d: (M, Cin) f32. Returns (M, Cout) f32."""
    M = x2d.shape[0]
    Cin_p, Cmid_p = w1_p.shape
    Mp = _round_up(M, 8)

    # Single pad op; allowed to fuse into the pallas_call (input fusion).
    x_p = jnp.pad(x2d, ((0, Mp - M), (0, Cin_p - cin)))

    flops = 2 * M * (cin * cmid + cmid * cout)
    bytes_accessed = (
        x_p.size * 4                          # activations in (f32)
        + w1_p.size * 2 + w2_p.size * 2       # bf16 weights
        + bias_cat.size * 4                   # f32 biases
        + Mp * Cin_p * 4                      # output (f32)
    )

    vmem_spec = pl.BlockSpec(memory_space=pltpu.MemorySpace.VMEM)
    out_p = pl.pallas_call(
        se_mlp_kernel,
        out_shape=jax.ShapeDtypeStruct((Mp, Cin_p), jnp.float32),
        in_specs=[vmem_spec] * 4,
        out_specs=vmem_spec,
        compiler_params=pltpu.CompilerParams(
            # activation pad/reshape may fuse into the call; weights/bias not.
            allow_input_fusion=[True, False, False, False]),
        cost_estimate=pl.CostEstimate(
            flops=flops, transcendentals=0, bytes_accessed=bytes_accessed),
    )(x_p, w1_p, bias_cat, w2_p)

    # NOTE: padded rows M..Mp-1 of out_p contain broadcast b2 (not zeros);
    # they are sliced off here and must not be consumed elsewhere.
    return out_p[:M, :cout]


def conv_relu_conv_1x1(x_nchw, params):
    """x_nchw: (N, Cin, H, W) f32. params: output of prepare_se_params."""
    N, Cin, H, W = x_nchw.shape
    cin, cmid, cout = params["Cin"], params["Cmid"], params["Cout"]

    if H == 1 and W == 1:
        # Pure reshape — no transpose op on this latency-bound path.
        x2d = x_nchw.reshape(N, Cin)
        out2d = _se_forward_2d(x2d, params["w1_p"], params["bias_cat"],
                               params["w2_p"], cin=cin, cmid=cmid, cout=cout)
        return out2d.reshape(N, cout, 1, 1)

    # General H,W path (not hit by this module's 1x1 spatial input).
    x2d = jnp.transpose(x_nchw, (0, 2, 3, 1)).reshape(N * H * W, Cin)
    out2d = _se_forward_2d(x2d, params["w1_p"], params["bias_cat"],
                           params["w2_p"], cin=cin, cmid=cmid, cout=cout)
    return jnp.transpose(out2d.reshape(N, H, W, cout), (0, 3, 1, 2))


if __name__ == "__main__":
    key = jax.random.PRNGKey(0)
    k_x, k_w1, k_b1, k_w2, k_b2 = jax.random.split(key, 5)

    N, Cin, H, W = 1, 888, 1, 1
    Cmid = 84

    # deterministic synthetic params (shapes per the torch module __init__)
    x = jax.random.normal(k_x, (N, Cin, H, W), jnp.float32)
    w1 = jax.random.normal(k_w1, (Cmid, Cin), jnp.float32) * (1.0 / Cin) ** 0.5
    b1 = jax.random.normal(k_b1, (Cmid,), jnp.float32) * 0.01
    w2 = jax.random.normal(k_w2, (Cin, Cmid), jnp.float32) * (1.0 / Cmid) ** 0.5
    b2 = jax.random.normal(k_b2, (Cin,), jnp.float32) * 0.01

    # one-time weight layout prep (not part of the per-call path)
    params = prepare_se_params(w1, b1, w2, b2)

    y = conv_relu_conv_1x1(x, params)
    y = jax.block_until_ready(y)

    # pure-JAX f32 reference (1x1 convs == channel matmuls).
    # bf16 weights in the kernel => compare with a looser tolerance.
    x2d = x.reshape(N, Cin)
    ref = jnp.maximum(x2d @ w1.T + b1, 0.0) @ w2.T + b2
    ref = ref.reshape(N, Cin, 1, 1)

    assert y.shape == (N, Cin, H, W), y.shape
    max_err = float(jnp.max(jnp.abs(y - ref)))
    assert jnp.allclose(y, ref, atol=5e-2, rtol=5e-2), max_err
    print("KERNEL_OK")
</pallas_src>

<mosaic_0001>
module attributes {stable_mosaic.version = 11 : i64} {
  func.func @se_mlp_kernel(%arg0: memref<8x896xf32, #tpu.memory_space<vmem>>, %arg1: memref<896x128xbf16, #tpu.memory_space<vmem>>, %arg2: memref<1x1024xf32, #tpu.memory_space<vmem>>, %arg3: memref<128x896xbf16, #tpu.memory_space<vmem>>, %arg4: memref<8x896xf32, #tpu.memory_space<vmem>>) attributes {dimension_semantics = [], scalar_prefetch = 0 : i64, scratch_operands = 0 : i64, tpu.core_type = #tpu.core_type<tc>} {
    %c0 = arith.constant 0 : index
    %c0_0 = arith.constant 0 : index
    %0 = vector.load %arg0[%c0, %c0_0] : memref<8x896xf32, #tpu.memory_space<vmem>>, vector<8x896xf32>
    %1 = arith.truncf %0 : vector<8x896xf32> to vector<8x896xbf16>
    %c0_1 = arith.constant 0 : index
    %c0_2 = arith.constant 0 : index
    %2 = vector.load %arg1[%c0_1, %c0_2] : memref<896x128xbf16, #tpu.memory_space<vmem>>, vector<896x128xbf16>
    %cst = arith.constant dense<0.000000e+00> : vector<8x128xf32>
    %3 = tpu.matmul %1, %2, %cst {dimension_numbers = #tpu.dot_dimension_numbers<[1], [0], [0], [1], [0, 0, 1, 1], [], []>} : vector<8x896xbf16>, vector<896x128xbf16>, vector<8x128xf32> -> vector<8x128xf32>
    %c0_3 = arith.constant 0 : index
    %c0_4 = arith.constant 0 : index
    %4 = vector.load %arg2[%c0_3, %c0_4] : memref<1x1024xf32, #tpu.memory_space<vmem>>, vector<1x128xf32>
    %5 = vector.broadcast %4 : vector<1x128xf32> to vector<8x128xf32>
    %6 = arith.addf %3, %5 : vector<8x128xf32>
    %cst_5 = arith.constant 0.000000e+00 : f32
    %7 = vector.broadcast %cst_5 : f32 to vector<8x128xf32>
    %8 = arith.maximumf %6, %7 : vector<8x128xf32>
    %9 = arith.truncf %8 : vector<8x128xf32> to vector<8x128xbf16>
    %c0_6 = arith.constant 0 : index
    %c0_7 = arith.constant 0 : index
    %10 = vector.load %arg3[%c0_6, %c0_7] : memref<128x896xbf16, #tpu.memory_space<vmem>>, vector<128x896xbf16>
    %cst_8 = arith.constant dense<0.000000e+00> : vector<8x896xf32>
    %11 = tpu.matmul %9, %10, %cst_8 {dimension_numbers = #tpu.dot_dimension_numbers<[1], [0], [0], [1], [0, 0, 1, 1], [], []>} : vector<8x128xbf16>, vector<128x896xbf16>, vector<8x896xf32> -> vector<8x896xf32>
    %c0_9 = arith.constant 0 : index
    %c128 = arith.constant 128 : index
    %12 = vector.load %arg2[%c0_9, %c128] : memref<1x1024xf32, #tpu.memory_space<vmem>>, vector<1x896xf32>
    %13 = vector.broadcast %12 : vector<1x896xf32> to vector<8x896xf32>
    %14 = arith.addf %11, %13 : vector<8x896xf32>
    %c0_10 = arith.constant 0 : index
    %c0_11 = arith.constant 0 : index
    %15 = vector.load %arg4[%c0_10, %c0_11] : memref<8x896xf32, #tpu.memory_space<vmem>>, vector<8x896xf32>
    tpu.vector_store %arg4[%c0_10, %c0_11], %14 {strides = array<i32>} : memref<8x896xf32, #tpu.memory_space<vmem>>, vector<8x896xf32>,
    return
  }
}

</mosaic_0001>

<llo_original>
// kernel: _se_forward_2d.2
$region0: #{_se_forward_2d.2}
  #allocation0 [shape = 'u32[]', space=smem, size = 0x4, offset = 0x4, fixed_abs, tag = 'smem constant byte address 0x4 - core index']
  #allocation1 [shape = 'u32[144,128]{1,0:T(1,128)}', space=vmem, size = 0x12000, scoped, tag = 'internal scratch']
  #allocation2 [shape = 'u32[2048]{0}', space=vmem, size = 0x2000, scoped, tag = 'scoped memory for _se_forward_2d.2']
  #allocation3 [shape = 'u32[2048]{0}', space=vmem, size = 0x2000, scoped, tag = 'scoped memory for _se_forward_2d.2']
  #allocation4 [shape = 'u32[2048]{0}', space=vmem, size = 0x2000, scoped, tag = 'scoped memory for _se_forward_2d.2']
  #allocation5 [shape = 'u32[2048]{0}', space=vmem, size = 0x2000, scoped, tag = 'scoped memory for _se_forward_2d.2']
  #allocation6 [shape = 'u32[2048]{0}', space=vmem, size = 0x2000, scoped, tag = 'scoped memory for _se_forward_2d.2']
  %s0 = inlined_call_operand.hbm [shape: bf16[896,128], index: 0, kind: input, shape index: {}]
  %s1 = inlined_call_operand.hbm [shape: f32[1,1024], index: 1, kind: input, shape index: {}]
  %s2 = inlined_call_operand.hbm [shape: bf16[128,896], index: 2, kind: input, shape index: {}]
  %s3 = inlined_call_operand.hbm [shape: f32[1,888], index: 3, kind: input, shape index: {}]
  %s4 = inlined_call_operand.<no memory space> [shape: f32[], index: 4, kind: input, shape index: {}]
  %s5 = inlined_call_operand.vmem [shape: f32[8,896], index: 5, kind: output, shape index: {}]
  %s6 = sld [smem:[#allocation0]]
  $region42: #{_se_forward_2d.2} parent=0
    _
  %s8 = ssub.s32 1, %s6
  %s9 = scalar_select 0, %s8, %s6
  %v10 = vstv %s4
  $region1: #{_se_forward_2d.2} parent=0
    #allocation7 [shape = 'u8[3584]{0}', space=vmem, size = 0x1000, scoped, tag = 'operand span for operand 3']
    #allocation8 [shape = 's32[1]{0}', space=sflag, size = 0x4, scoped, tag = 'scoped memory for _se_forward_2d.2']
    #allocation9 [shape = 'u8[229376]{0}', space=vmem, size = 0x38000, scoped, tag = 'input window, operand 1, single buffered']
    #allocation10 [shape = 's32[1]{0}', space=sflag, size = 0x4, scoped, tag = 'scoped memory for _se_forward_2d.2']
    #allocation11 [shape = 'u8[4096]{0}', space=vmem, size = 0x1000, scoped, tag = 'input window, operand 2, single buffered']
    #allocation12 [shape = 'u8[229376]{0}', space=vmem, size = 0x38000, scoped, tag = 'input window, operand 3, single buffered']
    #allocation13 [shape = 's32[1]{0}', space=sflag, size = 0x4, scoped, tag = 'scoped memory for _se_forward_2d.2']
    #allocation14 [shape = 'u8[28672]{0}', space=vmem, size = 0x7000, dematerialized = true, scoped, tag = 'FusionAdapter Buffer %fusion.1 = f32[8,896]{1,0:T(8,128)} fusion(%param_3.1, %param_4), kind=kLoop, calls=%fused_computation.1.clone, metadata={op_name="jit(_se_forward_2d)/jit(_pad)/pad" stack_frame_id=1}']
    %11 = vsyncpa [#allocation8], 0
    %12 = vsyncpa [#allocation10], 0
    %13 = vsyncpa [#allocation13], 0
    // Predicated region
    $region2: #{_se_forward_2d.2} parent=1 // pred_check
      _
    $region3: #{_se_forward_2d.2} parent=1 // pred_check_branch
      %15 = sbr.rel (0) target = $region5
    $region4: #{_se_forward_2d.2} parent=1 // pred_region
      %s17 = ssub.s32 112, 112
      %18 = vsyncadd [#allocation8], %s17
      %s20 = sshll.u32 [#allocation7], 4
      %s21 = int_to_ptr.vmem [resolvable:$true] %s20
      %23 = dma.hbm_to_vmem [thread:$0]  %s3, 112, %s21, [#allocation8]
    $region5: #{_se_forward_2d.2} parent=1 // pred_fallthru
      _
    // Predicated region
    $region6: #{_se_forward_2d.2} parent=1 // pred_check
      _
    $region7: #{_se_forward_2d.2} parent=1 // pred_check_branch
      %25 = sbr.rel (0) target = $region9
    $region8: #{_se_forward_2d.2} parent=1 // pred_region
      %s27 = ssub.s32 7168, 7168
      %28 = vsyncadd [#allocation10], %s27
      %s29 = sshll.u32 [#allocation9], 4
      %s30 = int_to_ptr.vmem [resolvable:$true] %s29
      %35 = dma.hbm_to_vmem [thread:$0]  %s0, 7168, %s30, [#allocation10], 64, 64, 4
    $region9: #{_se_forward_2d.2} parent=1 // pred_fallthru
      _
    // Predicated region
    $region10: #{_se_forward_2d.2} parent=1 // pred_check
      _
    $region11: #{_se_forward_2d.2} parent=1 // pred_check_branch
      %37 = sbr.rel (0) target = $region13
    $region12: #{_se_forward_2d.2} parent=1 // pred_region
      %s39 = ssub.s32 128, 128
      %40 = vsyncadd [#allocation10], %s39
      %s42 = sshll.u32 [#allocation11], 4
      %s43 = int_to_ptr.vmem [resolvable:$true] %s42
      %45 = dma.hbm_to_vmem [thread:$0]  %s1, 128, %s43, [#allocation10]
    $region13: #{_se_forward_2d.2} parent=1 // pred_fallthru
      _
    // Predicated region
    $region14: #{_se_forward_2d.2} parent=1 // pred_check
      _
    $region15: #{_se_forward_2d.2} parent=1 // pred_check_branch
      %47 = sbr.rel (0) target = $region17
    $region16: #{_se_forward_2d.2} parent=1 // pred_region
      %s49 = ssub.s32 7168, 7168
      %50 = vsyncadd [#allocation13], %s49
      %s51 = sshll.u32 [#allocation12], 4
      %s52 = int_to_ptr.vmem [resolvable:$true] %s51
      %57 = dma.hbm_to_vmem [thread:$0]  %s2, 7168, %s52, [#allocation13], 448, 448, 28
    $region17: #{_se_forward_2d.2} parent=1 // pred_fallthru
      _
    // Predicated region
    $region18: #{_se_forward_2d.2} parent=1 // pred_check
      _
    $region19: #{_se_forward_2d.2} parent=1 // pred_check_branch
      %59 = sbr.rel (0) target = $region21
    $region20: #{_se_forward_2d.2} parent=1 // pred_region
      %60 = dma.done [#allocation8], 112
    $region21: #{_se_forward_2d.2} parent=1 // pred_fallthru
      _
    // Predicated region
    $region22: #{_se_forward_2d.2} parent=1 // pred_check
      _
    $region23: #{_se_forward_2d.2} parent=1 // pred_check_branch
      %62 = sbr.rel (0) target = $region25
    $region24: #{_se_forward_2d.2} parent=1 // pred_region
      %63 = dma.done [#allocation10], 7168
    $region25: #{_se_forward_2d.2} parent=1 // pred_fallthru
      _
    // Predicated region
    $region26: #{_se_forward_2d.2} parent=1 // pred_check
      _
    $region27: #{_se_forward_2d.2} parent=1 // pred_check_branch
      %65 = sbr.rel (0) target = $region29
    $region28: #{_se_forward_2d.2} parent=1 // pred_region
      %66 = dma.done [#allocation10], 128
    $region29: #{_se_forward_2d.2} parent=1 // pred_fallthru
      _
    // Predicated region
    $region30: #{_se_forward_2d.2} parent=1 // pred_check
      _
    $region31: #{_se_forward_2d.2} parent=1 // pred_check_branch
      %68 = sbr.rel (0) target = $region33
    $region32: #{_se_forward_2d.2} parent=1 // pred_region
      %69 = dma.done [#allocation13], 7168
    $region33: #{_se_forward_2d.2} parent=1 // pred_fallthru
      _
    %v70 = vld [vmem:[#allocation7] sm:$0x1]
    %v71 = vlaneseq
    %v72 = vshrl.u32 %v71, 7
    %vm74 = vcmp.lt.s32.totalorder %v72, 1
    %v75 = vsel %vm74, %v70, %v10
    %v76 = vlaneseq
    %v77 = vand.u32 %v76, 127
    %vm79 = vcmp.lt.s32.totalorder %v77, 888
    %v80 = vsel %vm79, %v75, %v10
    %s82 = ssub.s32 256, 1
    %83 = vst [vmem:[#allocation14] sm:%s82] %v80
    %s84 = scalar_lea.vmem [#allocation7], 1
    %v85 = vld [vmem:[%s84] sm:$0x1]
    %v86 = vlaneseq
    %v87 = vshrl.u32 %v86, 7
    %vm89 = vcmp.lt.s32.totalorder %v87, 1
    %v90 = vsel %vm89, %v85, %v10
    %v91 = vlaneseq
    %v92 = vand.u32 %v91, 127
    %v93 = vadd.s32 %v92, 128
    %vm94 = vcmp.lt.s32.totalorder %v93, 888
    %v95 = vsel %vm94, %v90, %v10
    %s96 = scalar_lea.vmem [#allocation14], 8
    %s98 = ssub.s32 256, 1
    %99 = vst [vmem:[%s96] sm:%s98] %v95
    %s100 = scalar_lea.vmem [#allocation7], 2
    %v101 = vld [vmem:[%s100] sm:$0x1]
    %v102 = vlaneseq
    %v103 = vshrl.u32 %v102, 7
    %vm105 = vcmp.lt.s32.totalorder %v103, 1
    %v106 = vsel %vm105, %v101, %v10
    %v107 = vlaneseq
    %v108 = vand.u32 %v107, 127
    %v109 = vadd.s32 %v108, 256
    %vm110 = vcmp.lt.s32.totalorder %v109, 888
    %v111 = vsel %vm110, %v106, %v10
    %s112 = scalar_lea.vmem [#allocation14], 16
    %s114 = ssub.s32 256, 1
    %115 = vst [vmem:[%s112] sm:%s114] %v111
    %s116 = scalar_lea.vmem [#allocation7], 3
    %v117 = vld [vmem:[%s116] sm:$0x1]
    %v118 = vlaneseq
    %v119 = vshrl.u32 %v118, 7
    %vm121 = vcmp.lt.s32.totalorder %v119, 1
    %v122 = vsel %vm121, %v117, %v10
    %v123 = vlaneseq
    %v124 = vand.u32 %v123, 127
    %v125 = vadd.s32 %v124, 384
    %vm126 = vcmp.lt.s32.totalorder %v125, 888
    %v127 = vsel %vm126, %v122, %v10
    %s128 = scalar_lea.vmem [#allocation14], 24
    %s130 = ssub.s32 256, 1
    %131 = vst [vmem:[%s128] sm:%s130] %v127
    %s132 = scalar_lea.vmem [#allocation7], 4
    %v133 = vld [vmem:[%s132] sm:$0x1]
    %v134 = vlaneseq
    %v135 = vshrl.u32 %v134, 7
    %vm137 = vcmp.lt.s32.totalorder %v135, 1
    %v138 = vsel %vm137, %v133, %v10
    %v139 = vlaneseq
    %v140 = vand.u32 %v139, 127
    %v141 = vadd.s32 %v140, 512
    %vm142 = vcmp.lt.s32.totalorder %v141, 888
    %v143 = vsel %vm142, %v138, %v10
    %s144 = scalar_lea.vmem [#allocation14], 32
    %s146 = ssub.s32 256, 1
    %147 = vst [vmem:[%s144] sm:%s146] %v143
    %s148 = scalar_lea.vmem [#allocation7], 5
    %v149 = vld [vmem:[%s148] sm:$0x1]
    %v150 = vlaneseq
    %v151 = vshrl.u32 %v150, 7
    %vm153 = vcmp.lt.s32.totalorder %v151, 1
    %v154 = vsel %vm153, %v149, %v10
    %v155 = vlaneseq
    %v156 = vand.u32 %v155, 127
    %v157 = vadd.s32 %v156, 640
    %vm158 = vcmp.lt.s32.totalorder %v157, 888
    %v159 = vsel %vm158, %v154, %v10
    %s160 = scalar_lea.vmem [#allocation14], 40
    %s162 = ssub.s32 256, 1
    %163 = vst [vmem:[%s160] sm:%s162] %v159
    %s164 = scalar_lea.vmem [#allocation7], 6
    %v165 = vld [vmem:[%s164] sm:$0x1]
    %v166 = vlaneseq
    %v167 = vshrl.u32 %v166, 7
    %vm169 = vcmp.lt.s32.totalorder %v167, 1
    %v170 = vsel %vm169, %v165, %v10
    %v171 = vlaneseq
    %v172 = vand.u32 %v171, 127
    %v173 = vadd.s32 %v172, 768
    %vm174 = vcmp.lt.s32.totalorder %v173, 888
    %v175 = vsel %vm174, %v170, %v10
    %s176 = scalar_lea.vmem [#allocation14], 48
    %s178 = ssub.s32 256, 1
    %179 = vst [vmem:[%s176] sm:%s178] %v175
    %v181 = vld [vmem:[#allocation14] sm:$0xff]
    %v182 = vld [vmem:[#allocation14 + $0x8] sm:$0xff]
    %v183 = vld [vmem:[#allocation14 + $0x10] sm:$0xff]
    %v184 = vld [vmem:[#allocation14 + $0x18] sm:$0xff]
    %v185 = vld [vmem:[#allocation14 + $0x20] sm:$0xff]
    %v186 = vld [vmem:[#allocation14 + $0x28] sm:$0xff]
    %v187 = vld [vmem:[#allocation14 + $0x30] sm:$0xff]
    %v188 = vpack.c.bf16 %v181, %v181
    %v189 = vpack.c.bf16 %v182, %v182
    %v190 = vpack.c.bf16 %v183, %v183
    %v191 = vpack.c.bf16 %v184, %v184
    %v192 = vpack.c.bf16 %v185, %v185
    %v193 = vpack.c.bf16 %v186, %v186
    %v194 = vpack.c.bf16 %v187, %v187
    %v195 = vld [vmem:[#allocation9] sm:$0xf]
    %v196 = vld [vmem:[#allocation9 + $0x4] sm:$0xf]
    %v197 = vld [vmem:[#allocation9 + $0x8] sm:$0xf]
    %v198 = vld [vmem:[#allocation9 + $0xc] sm:$0xf]
    %v199 = vld [vmem:[#allocation9 + $0x10] sm:$0xf]
    %v200 = vld [vmem:[#allocation9 + $0x14] sm:$0xf]
    %v201 = vld [vmem:[#allocation9 + $0x18] sm:$0xf]
    %v202 = vld [vmem:[#allocation9 + $0x1c] sm:$0xf]
    %v203 = vld [vmem:[#allocation9 + $0x20] sm:$0xf]
    %v204 = vld [vmem:[#allocation9 + $0x24] sm:$0xf]
    %v205 = vld [vmem:[#allocation9 + $0x28] sm:$0xf]
    %v206 = vld [vmem:[#allocation9 + $0x2c] sm:$0xf]
    %v207 = vld [vmem:[#allocation9 + $0x30] sm:$0xf]
    %v208 = vld [vmem:[#allocation9 + $0x34] sm:$0xf]
    %v209 = vld [vmem:[#allocation9 + $0x38] sm:$0xf]
    %v210 = vld [vmem:[#allocation9 + $0x3c] sm:$0xf]
    %v211 = vld [vmem:[#allocation9 + $0x40] sm:$0xf]
    %v212 = vld [vmem:[#allocation9 + $0x44] sm:$0xf]
    %v213 = vld [vmem:[#allocation9 + $0x48] sm:$0xf]
    %v214 = vld [vmem:[#allocation9 + $0x4c] sm:$0xf]
    %v215 = vld [vmem:[#allocation9 + $0x50] sm:$0xf]
    %v216 = vld [vmem:[#allocation9 + $0x54] sm:$0xf]
    %v217 = vld [vmem:[#allocation9 + $0x58] sm:$0xf]
    %v218 = vld [vmem:[#allocation9 + $0x5c] sm:$0xf]
    %v219 = vld [vmem:[#allocation9 + $0x60] sm:$0xf]
    %v220 = vld [vmem:[#allocation9 + $0x64] sm:$0xf]
    %v221 = vld [vmem:[#allocation9 + $0x68] sm:$0xf]
    %v222 = vld [vmem:[#allocation9 + $0x6c] sm:$0xf]
    %v223 = vld [vmem:[#allocation9 + $0x70] sm:$0xf]
    %v224 = vld [vmem:[#allocation9 + $0x74] sm:$0xf]
    %v225 = vld [vmem:[#allocation9 + $0x78] sm:$0xf]
    %v226 = vld [vmem:[#allocation9 + $0x7c] sm:$0xf]
    %v227 = vld [vmem:[#allocation9 + $0x80] sm:$0xf]
    %v228 = vld [vmem:[#allocation9 + $0x84] sm:$0xf]
    %v229 = vld [vmem:[#allocation9 + $0x88] sm:$0xf]
    %v230 = vld [vmem:[#allocation9 + $0x8c] sm:$0xf]
    %v231 = vld [vmem:[#allocation9 + $0x90] sm:$0xf]
    %v232 = vld [vmem:[#allocation9 + $0x94] sm:$0xf]
    %v233 = vld [vmem:[#allocation9 + $0x98] sm:$0xf]
    %v234 = vld [vmem:[#allocation9 + $0x9c] sm:$0xf]
    %v235 = vld [vmem:[#allocation9 + $0xa0] sm:$0xf]
    %v236 = vld [vmem:[#allocation9 + $0xa4] sm:$0xf]
    %v237 = vld [vmem:[#allocation9 + $0xa8] sm:$0xf]
    %v238 = vld [vmem:[#allocation9 + $0xac] sm:$0xf]
    %v239 = vld [vmem:[#allocation9 + $0xb0] sm:$0xf]
    %v240 = vld [vmem:[#allocation9 + $0xb4] sm:$0xf]
    %v241 = vld [vmem:[#allocation9 + $0xb8] sm:$0xf]
    %v242 = vld [vmem:[#allocation9 + $0xbc] sm:$0xf]
    %v243 = vld [vmem:[#allocation9 + $0xc0] sm:$0xf]
    %v244 = vld [vmem:[#allocation9 + $0xc4] sm:$0xf]
    %v245 = vld [vmem:[#allocation9 + $0xc8] sm:$0xf]
    %v246 = vld [vmem:[#allocation9 + $0xcc] sm:$0xf]
    %v247 = vld [vmem:[#allocation9 + $0xd0] sm:$0xf]
    %v248 = vld [vmem:[#allocation9 + $0xd4] sm:$0xf]
    %v249 = vld [vmem:[#allocation9 + $0xd8] sm:$0xf]
    %v250 = vld [vmem:[#allocation9 + $0xdc] sm:$0xf]
    %v251 = vld [vmem:[#allocation9 + $0xe0] sm:$0xf]
    %v252 = vld [vmem:[#allocation9 + $0xe4] sm:$0xf]
    %v253 = vld [vmem:[#allocation9 + $0xe8] sm:$0xf]
    %v254 = vld [vmem:[#allocation9 + $0xec] sm:$0xf]
    %v255 = vld [vmem:[#allocation9 + $0xf0] sm:$0xf]
    %v256 = vld [vmem:[#allocation9 + $0xf4] sm:$0xf]
    %v257 = vld [vmem:[#allocation9 + $0xf8] sm:$0xf]
    %v258 = vld [vmem:[#allocation9 + $0xfc] sm:$0xf]
    %v259 = vld [vmem:[#allocation9 + $0x100] sm:$0xf]
    %v260 = vld [vmem:[#allocation9 + $0x104] sm:$0xf]
    %v261 = vld [vmem:[#allocation9 + $0x108] sm:$0xf]
    %v262 = vld [vmem:[#allocation9 + $0x10c] sm:$0xf]
    %v263 = vld [vmem:[#allocation9 + $0x110] sm:$0xf]
    %v264 = vld [vmem:[#allocation9 + $0x114] sm:$0xf]
    %v265 = vld [vmem:[#allocation9 + $0x118] sm:$0xf]
    %v266 = vld [vmem:[#allocation9 + $0x11c] sm:$0xf]
    %v267 = vld [vmem:[#allocation9 + $0x120] sm:$0xf]
    %v268 = vld [vmem:[#allocation9 + $0x124] sm:$0xf]
    %v269 = vld [vmem:[#allocation9 + $0x128] sm:$0xf]
    %v270 = vld [vmem:[#allocation9 + $0x12c] sm:$0xf]
    %v271 = vld [vmem:[#allocation9 + $0x130] sm:$0xf]
    %v272 = vld [vmem:[#allocation9 + $0x134] sm:$0xf]
    %v273 = vld [vmem:[#allocation9 + $0x138] sm:$0xf]
    %v274 = vld [vmem:[#allocation9 + $0x13c] sm:$0xf]
    %v275 = vld [vmem:[#allocation9 + $0x140] sm:$0xf]
    %v276 = vld [vmem:[#allocation9 + $0x144] sm:$0xf]
    %v277 = vld [vmem:[#allocation9 + $0x148] sm:$0xf]
    %v278 = vld [vmem:[#allocation9 + $0x14c] sm:$0xf]
    %v279 = vld [vmem:[#allocation9 + $0x150] sm:$0xf]
    %v280 = vld [vmem:[#allocation9 + $0x154] sm:$0xf]
    %v281 = vld [vmem:[#allocation9 + $0x158] sm:$0xf]
    %v282 = vld [vmem:[#allocation9 + $0x15c] sm:$0xf]
    %v283 = vld [vmem:[#allocation9 + $0x160] sm:$0xf]
    %v284 = vld [vmem:[#allocation9 + $0x164] sm:$0xf]
    %v285 = vld [vmem:[#allocation9 + $0x168] sm:$0xf]
    %v286 = vld [vmem:[#allocation9 + $0x16c] sm:$0xf]
    %v287 = vld [vmem:[#allocation9 + $0x170] sm:$0xf]
    %v288 = vld [vmem:[#allocation9 + $0x174] sm:$0xf]
    %v289 = vld [vmem:[#allocation9 + $0x178] sm:$0xf]
    %v290 = vld [vmem:[#allocation9 + $0x17c] sm:$0xf]
    %v291 = vld [vmem:[#allocation9 + $0x180] sm:$0xf]
    %v292 = vld [vmem:[#allocation9 + $0x184] sm:$0xf]
    %v293 = vld [vmem:[#allocation9 + $0x188] sm:$0xf]
    %v294 = vld [vmem:[#allocation9 + $0x18c] sm:$0xf]
    %v295 = vld [vmem:[#allocation9 + $0x190] sm:$0xf]
    %v296 = vld [vmem:[#allocation9 + $0x194] sm:$0xf]
    %v297 = vld [vmem:[#allocation9 + $0x198] sm:$0xf]
    %v298 = vld [vmem:[#allocation9 + $0x19c] sm:$0xf]
    %v299 = vld [vmem:[#allocation9 + $0x1a0] sm:$0xf]
    %v300 = vld [vmem:[#allocation9 + $0x1a4] sm:$0xf]
    %v301 = vld [vmem:[#allocation9 + $0x1a8] sm:$0xf]
    %v302 = vld [vmem:[#allocation9 + $0x1ac] sm:$0xf]
    %v303 = vld [vmem:[#allocation9 + $0x1b0] sm:$0xf]
    %v304 = vld [vmem:[#allocation9 + $0x1b4] sm:$0xf]
    %v305 = vld [vmem:[#allocation9 + $0x1b8] sm:$0xf]
    %v306 = vld [vmem:[#allocation9 + $0x1bc] sm:$0xf]
    %v307 = vld [vmem:[#allocation11] sm:$0x1]
    %v309 = vlaneseq
    %v310 = vshrl.u32 %v309, 7
    %v311 = vsub.s32 0, %v310
    %v312 = vrot.slane %v307, %v311
    %v426 = vunpack.c.l.b16 %v195
    %v427 = vunpack.c.l.b16 %v196
    %v428 = vunpack.c.l.b16 %v197
    %v429 = vunpack.c.l.b16 %v198
    %v430 = vunpack.c.l.b16 %v199
    %v431 = vunpack.c.l.b16 %v200
    %v432 = vunpack.c.l.b16 %v201
    %v433 = vunpack.c.l.b16 %v202
    %v434 = vunpack.c.l.b16 %v203
    %v435 = vunpack.c.l.b16 %v204
    %v436 = vunpack.c.l.b16 %v205
    %v437 = vunpack.c.l.b16 %v206
    %v438 = vunpack.c.l.b16 %v207
    %v439 = vunpack.c.l.b16 %v208
    %v440 = vunpack.c.l.b16 %v209
    %v441 = vunpack.c.l.b16 %v210
    %v442 = vunpack.c.l.b16 %v211
    %v443 = vunpack.c.l.b16 %v212
    %v444 = vunpack.c.l.b16 %v213
    %v445 = vunpack.c.l.b16 %v214
    %v446 = vunpack.c.l.b16 %v215
    %v447 = vunpack.c.l.b16 %v216
    %v448 = vunpack.c.l.b16 %v217
    %v449 = vunpack.c.l.b16 %v218
    %v450 = vunpack.c.l.b16 %v219
    %v451 = vunpack.c.l.b16 %v220
    %v452 = vunpack.c.l.b16 %v221
    %v453 = vunpack.c.l.b16 %v222
    %v454 = vunpack.c.l.b16 %v223
    %v455 = vunpack.c.l.b16 %v224
    %v456 = vunpack.c.l.b16 %v225
    %v457 = vunpack.c.l.b16 %v226
    %v458 = vunpack.c.l.b16 %v227
    %v459 = vunpack.c.l.b16 %v228
    %v460 = vunpack.c.l.b16 %v229
    %v461 = vunpack.c.l.b16 %v230
    %v462 = vunpack.c.l.b16 %v231
    %v463 = vunpack.c.l.b16 %v232
    %v464 = vunpack.c.l.b16 %v233
    %v465 = vunpack.c.l.b16 %v234
    %v466 = vunpack.c.l.b16 %v235
    %v467 = vunpack.c.l.b16 %v236
    %v468 = vunpack.c.l.b16 %v237
    %v469 = vunpack.c.l.b16 %v238
    %v470 = vunpack.c.l.b16 %v239
    %v471 = vunpack.c.l.b16 %v240
    %v472 = vunpack.c.l.b16 %v241
    %v473 = vunpack.c.l.b16 %v242
    %v474 = vunpack.c.l.b16 %v243
    %v475 = vunpack.c.l.b16 %v244
    %v476 = vunpack.c.l.b16 %v245
    %v477 = vunpack.c.l.b16 %v246
    %v478 = vunpack.c.l.b16 %v247
    %v479 = vunpack.c.l.b16 %v248
    %v480 = vunpack.c.l.b16 %v249
    %v481 = vunpack.c.l.b16 %v250
    %v482 = vunpack.c.l.b16 %v251
    %v483 = vunpack.c.l.b16 %v252
    %v484 = vunpack.c.l.b16 %v253
    %v485 = vunpack.c.l.b16 %v254
    %v486 = vunpack.c.l.b16 %v255
    %v487 = vunpack.c.l.b16 %v256
    %v488 = vunpack.c.l.b16 %v257
    %v489 = vunpack.c.l.b16 %v258
    %v490 = vunpack.c.l.b16 %v259
    %v491 = vunpack.c.l.b16 %v260
    %v492 = vunpack.c.l.b16 %v261
    %v493 = vunpack.c.l.b16 %v262
    %v494 = vunpack.c.l.b16 %v263
    %v495 = vunpack.c.l.b16 %v264
    %v496 = vunpack.c.l.b16 %v265
    %v497 = vunpack.c.l.b16 %v266
    %v498 = vunpack.c.l.b16 %v267
    %v499 = vunpack.c.l.b16 %v268
    %v500 = vunpack.c.l.b16 %v269
    %v501 = vunpack.c.l.b16 %v270
    %v502 = vunpack.c.l.b16 %v271
    %v503 = vunpack.c.l.b16 %v272
    %v504 = vunpack.c.l.b16 %v273
    %v505 = vunpack.c.l.b16 %v274
    %v506 = vunpack.c.l.b16 %v275
    %v507 = vunpack.c.l.b16 %v276
    %v508 = vunpack.c.l.b16 %v277
    %v509 = vunpack.c.l.b16 %v278
    %v510 = vunpack.c.l.b16 %v279
    %v511 = vunpack.c.l.b16 %v280
    %v512 = vunpack.c.l.b16 %v281
    %v513 = vunpack.c.l.b16 %v282
    %v514 = vunpack.c.l.b16 %v283
    %v515 = vunpack.c.l.b16 %v284
    %v516 = vunpack.c.l.b16 %v285
    %v517 = vunpack.c.l.b16 %v286
    %v518 = vunpack.c.l.b16 %v287
    %v519 = vunpack.c.l.b16 %v288
    %v520 = vunpack.c.l.b16 %v289
    %v521 = vunpack.c.l.b16 %v290
    %v522 = vunpack.c.l.b16 %v291
    %v523 = vunpack.c.l.b16 %v292
    %v524 = vunpack.c.l.b16 %v293
    %v525 = vunpack.c.l.b16 %v294
    %v526 = vunpack.c.l.b16 %v295
    %v527 = vunpack.c.l.b16 %v296
    %v528 = vunpack.c.l.b16 %v297
    %v529 = vunpack.c.l.b16 %v298
    %v530 = vunpack.c.l.b16 %v299
    %v531 = vunpack.c.l.b16 %v300
    %v532 = vunpack.c.l.b16 %v301
    %v533 = vunpack.c.l.b16 %v302
    %v534 = vunpack.c.l.b16 %v303
    %v535 = vunpack.c.l.b16 %v304
    %v536 = vunpack.c.l.b16 %v305
    %v537 = vunpack.c.l.b16 %v306
    %v538 = vpack.c.b16 %v427, %v426
    %v539 = vpack.c.b16 %v429, %v428
    %v540 = vpack.c.b16 %v431, %v430
    %v541 = vpack.c.b16 %v433, %v432
    %v542 = vpack.c.b16 %v435, %v434
    %v543 = vpack.c.b16 %v437, %v436
    %v544 = vpack.c.b16 %v439, %v438
    %v545 = vpack.c.b16 %v441, %v440
    %v546 = vpack.c.b16 %v443, %v442
    %v547 = vpack.c.b16 %v445, %v444
    %v548 = vpack.c.b16 %v447, %v446
    %v549 = vpack.c.b16 %v449, %v448
    %v550 = vpack.c.b16 %v451, %v450
    %v551 = vpack.c.b16 %v453, %v452
    %v552 = vpack.c.b16 %v455, %v454
    %v553 = vpack.c.b16 %v457, %v456
    %v554 = vpack.c.b16 %v459, %v458
    %v555 = vpack.c.b16 %v461, %v460
    %v556 = vpack.c.b16 %v463, %v462
    %v557 = vpack.c.b16 %v465, %v464
    %v558 = vpack.c.b16 %v467, %v466
    %v559 = vpack.c.b16 %v469, %v468
    %v560 = vpack.c.b16 %v471, %v470
    %v561 = vpack.c.b16 %v473, %v472
    %v562 = vpack.c.b16 %v475, %v474
    %v563 = vpack.c.b16 %v477, %v476
    %v564 = vpack.c.b16 %v479, %v478
    %v565 = vpack.c.b16 %v481, %v480
    %v566 = vpack.c.b16 %v483, %v482
    %v567 = vpack.c.b16 %v485, %v484
    %v568 = vpack.c.b16 %v487, %v486
    %v569 = vpack.c.b16 %v489, %v488
    %v570 = vpack.c.b16 %v491, %v490
    %v571 = vpack.c.b16 %v493, %v492
    %v572 = vpack.c.b16 %v495, %v494
    %v573 = vpack.c.b16 %v497, %v496
    %v574 = vpack.c.b16 %v499, %v498
    %v575 = vpack.c.b16 %v501, %v500
    %v576 = vpack.c.b16 %v503, %v502
    %v577 = vpack.c.b16 %v505, %v504
    %v578 = vpack.c.b16 %v507, %v506
    %v579 = vpack.c.b16 %v509, %v508
    %v580 = vpack.c.b16 %v511, %v510
    %v581 = vpack.c.b16 %v513, %v512
    %v582 = vpack.c.b16 %v515, %v514
    %v583 = vpack.c.b16 %v517, %v516
    %v584 = vpack.c.b16 %v519, %v518
    %v585 = vpack.c.b16 %v521, %v520
    %v586 = vpack.c.b16 %v523, %v522
    %v587 = vpack.c.b16 %v525, %v524
    %v588 = vpack.c.b16 %v527, %v526
    %v589 = vpack.c.b16 %v529, %v528
    %v590 = vpack.c.b16 %v531, %v530
    %v591 = vpack.c.b16 %v533, %v532
    %v592 = vpack.c.b16 %v535, %v534
    %v593 = vpack.c.b16 %v537, %v536
    %650 = vmatprep.subr.bf16.mxu0 0
    %651 = vmatpush1.bf16.msra.mxu0 %v545
    %652 = vmatprep.subr.bf16.mxu0 0
    %653 = vmatpush1.bf16.msra.mxu0 %v544
    %654 = vmatprep.subr.bf16.mxu0 0
    %655 = vmatpush1.bf16.msra.mxu0 %v543
    %656 = vmatprep.subr.bf16.mxu0 0
    %657 = vmatpush1.bf16.msra.mxu0 %v542
    %658 = vmatprep.subr.bf16.mxu0 0
    %659 = vmatpush1.bf16.msra.mxu0 %v541
    %660 = vmatprep.subr.bf16.mxu0 0
    %661 = vmatpush1.bf16.msra.mxu0 %v540
    %662 = vmatprep.subr.bf16.mxu0 0
    %663 = vmatpush1.bf16.msra.mxu0 %v539
    %664 = vmatprep.subr.bf16.mxu0 0
    %665 = vmatpush1.bf16.msra.mxu0 %v538
    %666 = vmatprep.subr.bf16.mxu0 0
    %667 = vmatpush2.bf16.msra.mxu0 %v553
    %668 = vmatprep.subr.bf16.mxu0 0
    %669 = vmatpush2.bf16.msra.mxu0 %v552
    %670 = vmatprep.subr.bf16.mxu0 0
    %671 = vmatpush2.bf16.msra.mxu0 %v551
    %672 = vmatprep.subr.bf16.mxu0 0
    %673 = vmatpush2.bf16.msra.mxu0 %v550
    %674 = vmatprep.subr.bf16.mxu0 0
    %675 = vmatpush2.bf16.msra.mxu0 %v549
    %676 = vmatprep.subr.bf16.mxu0 0
    %677 = vmatpush2.bf16.msra.mxu0 %v548
    %678 = vmatprep.subr.bf16.mxu0 0
    %679 = vmatpush2.bf16.msra.mxu0 %v547
    %680 = vmatprep.subr.bf16.mxu0 0
    %681 = vmatpush2.bf16.msra.mxu0 %v546
    %682 = vmatprep.mubr.bf16.mxu0 %v189
    %683 = vmatmul.mubr.bf16.gmra.mxu0 %v188
    %v684 = vpop.f32.mrf.mxu0
    %v685 = vadd.f32 %v312, %v684
    %v686 = vpop.f32.mrf.mxu0
    %v687 = vpop.f32.mrf.mxu0
    %v688 = vpop.f32.mrf.mxu0
    %689 = vdwg.mxu0
    %690 = vmatprep.subr.bf16.mxu0 0
    %691 = vmatpush1.bf16.msra.mxu0 %v561
    %692 = vmatprep.subr.bf16.mxu0 0
    %693 = vmatpush1.bf16.msra.mxu0 %v560
    %694 = vmatprep.subr.bf16.mxu0 0
    %695 = vmatpush1.bf16.msra.mxu0 %v559
    %696 = vmatprep.subr.bf16.mxu0 0
    %697 = vmatpush1.bf16.msra.mxu0 %v558
    %698 = vmatprep.subr.bf16.mxu0 0
    %699 = vmatpush1.bf16.msra.mxu0 %v557
    %700 = vmatprep.subr.bf16.mxu0 0
    %701 = vmatpush1.bf16.msra.mxu0 %v556
    %702 = vmatprep.subr.bf16.mxu0 0
    %703 = vmatpush1.bf16.msra.mxu0 %v555
    %704 = vmatprep.subr.bf16.mxu0 0
    %705 = vmatpush1.bf16.msra.mxu0 %v554
    %706 = vmatprep.subr.bf16.mxu0 0
    %707 = vmatpush2.bf16.msra.mxu0 %v569
    %708 = vmatprep.subr.bf16.mxu0 0
    %709 = vmatpush2.bf16.msra.mxu0 %v568
    %710 = vmatprep.subr.bf16.mxu0 0
    %711 = vmatpush2.bf16.msra.mxu0 %v567
    %712 = vmatprep.subr.bf16.mxu0 0
    %713 = vmatpush2.bf16.msra.mxu0 %v566
    %714 = vmatprep.subr.bf16.mxu0 0
    %715 = vmatpush2.bf16.msra.mxu0 %v565
    %716 = vmatprep.subr.bf16.mxu0 0
    %717 = vmatpush2.bf16.msra.mxu0 %v564
    %718 = vmatprep.subr.bf16.mxu0 0
    %719 = vmatpush2.bf16.msra.mxu0 %v563
    %720 = vmatprep.subr.bf16.mxu0 0
    %721 = vmatpush2.bf16.msra.mxu0 %v562
    %722 = vmatprep.mubr.bf16.mxu0 %v191
    %723 = vmatmul.mubr.bf16.gmra.mxu0 %v190
    %v724 = vpop.f32.mrf.mxu0
    %v725 = vadd.f32 %v685, %v724
    %v726 = vpop.f32.mrf.mxu0
    %v727 = vpop.f32.mrf.mxu0
    %v728 = vpop.f32.mrf.mxu0
    %729 = vdwg.mxu0
    %730 = vmatprep.subr.bf16.mxu0 0
    %731 = vmatpush1.bf16.msra.mxu0 %v577
    %732 = vmatprep.subr.bf16.mxu0 0
    %733 = vmatpush1.bf16.msra.mxu0 %v576
    %734 = vmatprep.subr.bf16.mxu0 0
    %735 = vmatpush1.bf16.msra.mxu0 %v575
    %736 = vmatprep.subr.bf16.mxu0 0
    %737 = vmatpush1.bf16.msra.mxu0 %v574
    %738 = vmatprep.subr.bf16.mxu0 0
    %739 = vmatpush1.bf16.msra.mxu0 %v573
    %740 = vmatprep.subr.bf16.mxu0 0
    %741 = vmatpush1.bf16.msra.mxu0 %v572
    %742 = vmatprep.subr.bf16.mxu0 0
    %743 = vmatpush1.bf16.msra.mxu0 %v571
    %744 = vmatprep.subr.bf16.mxu0 0
    %745 = vmatpush1.bf16.msra.mxu0 %v570
    %746 = vmatprep.subr.bf16.mxu0 0
    %747 = vmatpush2.bf16.msra.mxu0 %v585
    %748 = vmatprep.subr.bf16.mxu0 0
    %749 = vmatpush2.bf16.msra.mxu0 %v584
    %750 = vmatprep.subr.bf16.mxu0 0
    %751 = vmatpush2.bf16.msra.mxu0 %v583
    %752 = vmatprep.subr.bf16.mxu0 0
    %753 = vmatpush2.bf16.msra.mxu0 %v582
    %754 = vmatprep.subr.bf16.mxu0 0
    %755 = vmatpush2.bf16.msra.mxu0 %v581
    %756 = vmatprep.subr.bf16.mxu0 0
    %757 = vmatpush2.bf16.msra.mxu0 %v580
    %758 = vmatprep.subr.bf16.mxu0 0
    %759 = vmatpush2.bf16.msra.mxu0 %v579
    %760 = vmatprep.subr.bf16.mxu0 0
    %761 = vmatpush2.bf16.msra.mxu0 %v578
    %762 = vmatprep.mubr.bf16.mxu0 %v193
    %763 = vmatmul.mubr.bf16.gmra.mxu0 %v192
    %v764 = vpop.f32.mrf.mxu0
    %v765 = vadd.f32 %v725, %v764
    %v766 = vpop.f32.mrf.mxu0
    %v767 = vpop.f32.mrf.mxu0
    %v768 = vpop.f32.mrf.mxu0
    %769 = vdwg.mxu0
    %770 = vmatprep.subr.bf16.mxu0 0
    %771 = vmatpush1.bf16.msra.mxu0 %v593
    %772 = vmatprep.subr.bf16.mxu0 0
    %773 = vmatpush1.bf16.msra.mxu0 %v592
    %774 = vmatprep.subr.bf16.mxu0 0
    %775 = vmatpush1.bf16.msra.mxu0 %v591
    %776 = vmatprep.subr.bf16.mxu0 0
    %777 = vmatpush1.bf16.msra.mxu0 %v590
    %778 = vmatprep.subr.bf16.mxu0 0
    %779 = vmatpush1.bf16.msra.mxu0 %v589
    %780 = vmatprep.subr.bf16.mxu0 0
    %781 = vmatpush1.bf16.msra.mxu0 %v588
    %782 = vmatprep.subr.bf16.mxu0 0
    %783 = vmatpush1.bf16.msra.mxu0 %v587
    %784 = vmatprep.subr.bf16.mxu0 0
    %785 = vmatpush1.bf16.msra.mxu0 %v586
    %786 = vmatprep.subr.bf16.mxu0 0
    %787 = vmatpush2.bf16.msra.mxu0 0
    %788 = vmatprep.subr.bf16.mxu0 0
    %789 = vmatpush2.bf16.msra.mxu0 0
    %790 = vmatprep.subr.bf16.mxu0 0
    %791 = vmatpush2.bf16.msra.mxu0 0
    %792 = vmatprep.subr.bf16.mxu0 0
    %793 = vmatpush2.bf16.msra.mxu0 0
    %794 = vmatprep.subr.bf16.mxu0 0
    %795 = vmatpush2.bf16.msra.mxu0 0
    %796 = vmatprep.subr.bf16.mxu0 0
    %797 = vmatpush2.bf16.msra.mxu0 0
    %798 = vmatprep.subr.bf16.mxu0 0
    %799 = vmatpush2.bf16.msra.mxu0 0
    %800 = vmatprep.subr.bf16.mxu0 0
    %801 = vmatpush2.bf16.msra.mxu0 0
    %802 = vmatprep.mubr.bf16.mxu0 0
    %803 = vmatmul.mubr.bf16.gmra.mxu0 %v194
    %v804 = vpop.f32.mrf.mxu0
    %v805 = vadd.f32 %v765, %v804
    %v806 = vpop.f32.mrf.mxu0
    %v807 = vpop.f32.mrf.mxu0
    %v808 = vpop.f32.mrf.mxu0
    %809 = vdwg.mxu0
    %v810 = vmax.f32 %v805, 0.0
    %v811 = vpack.c.bf16 %v810, %v810
    %v812 = vld [vmem:[#allocation12] sm:$0xff]
    %v813 = vld [vmem:[#allocation12 + $0x8] sm:$0xff]
    %v814 = vld [vmem:[#allocation12 + $0x10] sm:$0xff]
    %v815 = vld [vmem:[#allocation12 + $0x18] sm:$0xf]
    %v816 = vld [vmem:[#allocation12 + $0x1c] sm:$0xff]
    %v817 = vld [vmem:[#allocation12 + $0x24] sm:$0xff]
    %v818 = vld [vmem:[#allocation12 + $0x2c] sm:$0xff]
    %v819 = vld [vmem:[#allocation12 + $0x34] sm:$0xf]
    %v820 = vld [vmem:[#allocation12 + $0x38] sm:$0xff]
    %v821 = vld [vmem:[#allocation12 + $0x40] sm:$0xff]
    %v822 = vld [vmem:[#allocation12 + $0x48] sm:$0xff]
    %v823 = vld [vmem:[#allocation12 + $0x50] sm:$0xf]
    %v824 = vld [vmem:[#allocation12 + $0x54] sm:$0xff]
    %v825 = vld [vmem:[#allocation12 + $0x5c] sm:$0xff]
    %v826 = vld [vmem:[#allocation12 + $0x64] sm:$0xff]
    %v827 = vld [vmem:[#allocation12 + $0x6c] sm:$0xf]
    %v828 = vld [vmem:[#allocation12 + $0x70] sm:$0xff]
    %v829 = vld [vmem:[#allocation12 + $0x78] sm:$0xff]
    %v830 = vld [vmem:[#allocation12 + $0x80] sm:$0xff]
    %v831 = vld [vmem:[#allocation12 + $0x88] sm:$0xf]
    %v832 = vld [vmem:[#allocation12 + $0x8c] sm:$0xff]
    %v833 = vld [vmem:[#allocation12 + $0x94] sm:$0xff]
    %v834 = vld [vmem:[#allocation12 + $0x9c] sm:$0xff]
    %v835 = vld [vmem:[#allocation12 + $0xa4] sm:$0xf]
    %v836 = vld [vmem:[#allocation12 + $0xa8] sm:$0xff]
    %v837 = vld [vmem:[#allocation12 + $0xb0] sm:$0xff]
    %v838 = vld [vmem:[#allocation12 + $0xb8] sm:$0xff]
    %v839 = vld [vmem:[#allocation12 + $0xc0] sm:$0xf]
    %v840 = vld [vmem:[#allocation12 + $0xc4] sm:$0xff]
    %v841 = vld [vmem:[#allocation12 + $0xcc] sm:$0xff]
    %v842 = vld [vmem:[#allocation12 + $0xd4] sm:$0xff]
    %v843 = vld [vmem:[#allocation12 + $0xdc] sm:$0xf]
    %v844 = vld [vmem:[#allocation12 + $0xe0] sm:$0xff]
    %v845 = vld [vmem:[#allocation12 + $0xe8] sm:$0xff]
    %v846 = vld [vmem:[#allocation12 + $0xf0] sm:$0xff]
    %v847 = vld [vmem:[#allocation12 + $0xf8] sm:$0xf]
    %v848 = vld [vmem:[#allocation12 + $0xfc] sm:$0xff]
    %v849 = vld [vmem:[#allocation12 + $0x104] sm:$0xff]
    %v850 = vld [vmem:[#allocation12 + $0x10c] sm:$0xff]
    %v851 = vld [vmem:[#allocation12 + $0x114] sm:$0xf]
    %v852 = vld [vmem:[#allocation12 + $0x118] sm:$0xff]
    %v853 = vld [vmem:[#allocation12 + $0x120] sm:$0xff]
    %v854 = vld [vmem:[#allocation12 + $0x128] sm:$0xff]
    %v855 = vld [vmem:[#allocation12 + $0x130] sm:$0xf]
    %v856 = vld [vmem:[#allocation12 + $0x134] sm:$0xff]
    %v857 = vld [vmem:[#allocation12 + $0x13c] sm:$0xff]
    %v858 = vld [vmem:[#allocation12 + $0x144] sm:$0xff]
    %v859 = vld [vmem:[#allocation12 + $0x14c] sm:$0xf]
    %v860 = vld [vmem:[#allocation12 + $0x150] sm:$0xff]
    %v861 = vld [vmem:[#allocation12 + $0x158] sm:$0xff]
    %v862 = vld [vmem:[#allocation12 + $0x160] sm:$0xff]
    %v863 = vld [vmem:[#allocation12 + $0x168] sm:$0xf]
    %v864 = vld [vmem:[#allocation12 + $0x16c] sm:$0xff]
    %v865 = vld [vmem:[#allocation12 + $0x174] sm:$0xff]
    %v866 = vld [vmem:[#allocation12 + $0x17c] sm:$0xff]
    %v867 = vld [vmem:[#allocation12 + $0x184] sm:$0xf]
    %v868 = vld [vmem:[#allocation12 + $0x188] sm:$0xff]
    %v869 = vld [vmem:[#allocation12 + $0x190] sm:$0xff]
    %v870 = vld [vmem:[#allocation12 + $0x198] sm:$0xff]
    %v871 = vld [vmem:[#allocation12 + $0x1a0] sm:$0xf]
    %v872 = vld [vmem:[#allocation12 + $0x1a4] sm:$0xff]
    %v873 = vld [vmem:[#allocation12 + $0x1ac] sm:$0xff]
    %v874 = vld [vmem:[#allocation12 + $0x1b4] sm:$0xff]
    %v875 = vld [vmem:[#allocation12 + $0x1bc] sm:$0xf]
    %v876 = vld [vmem:[#allocation11 + $0x1] sm:$0xff]
    %v878 = vlaneseq
    %v879 = vshrl.u32 %v878, 7
    %v880 = vsub.s32 0, %v879
    %v881 = vrot.slane %v876, %v880
    %v882 = vlaneseq
    %v883 = vshrl.u32 %v882, 7
    %v884 = vsub.s32 1, %v883
    %v885 = vrot.slane %v876, %v884
    %v886 = vlaneseq
    %v887 = vshrl.u32 %v886, 7
    %v888 = vsub.s32 2, %v887
    %v889 = vrot.slane %v876, %v888
    %v890 = vlaneseq
    %v891 = vshrl.u32 %v890, 7
    %v892 = vsub.s32 3, %v891
    %v893 = vrot.slane %v876, %v892
    %v894 = vlaneseq
    %v895 = vshrl.u32 %v894, 7
    %v896 = vsub.s32 4, %v895
    %v897 = vrot.slane %v876, %v896
    %v898 = vlaneseq
    %v899 = vshrl.u32 %v898, 7
    %v900 = vsub.s32 5, %v899
    %v901 = vrot.slane %v876, %v900
    %v902 = vlaneseq
    %v903 = vshrl.u32 %v902, 7
    %v904 = vsub.s32 6, %v903
    %v905 = vrot.slane %v876, %v904
    %v977 = vunpack.c.l.b16 %v812
    %v978 = vunpack.c.h.b16 %v812
    %v979 = vunpack.c.l.b16 %v813
    %v980 = vunpack.c.h.b16 %v813
    %v981 = vunpack.c.l.b16 %v814
    %v982 = vunpack.c.h.b16 %v814
    %v983 = vunpack.c.l.b16 %v815
    %v984 = vunpack.c.l.b16 %v816
    %v985 = vunpack.c.h.b16 %v816
    %v986 = vunpack.c.l.b16 %v817
    %v987 = vunpack.c.h.b16 %v817
    %v988 = vunpack.c.l.b16 %v818
    %v989 = vunpack.c.h.b16 %v818
    %v990 = vunpack.c.l.b16 %v819
    %v991 = vunpack.c.l.b16 %v820
    %v992 = vunpack.c.h.b16 %v820
    %v993 = vunpack.c.l.b16 %v821
    %v994 = vunpack.c.h.b16 %v821
    %v995 = vunpack.c.l.b16 %v822
    %v996 = vunpack.c.h.b16 %v822
    %v997 = vunpack.c.l.b16 %v823
    %v998 = vunpack.c.l.b16 %v824
    %v999 = vunpack.c.h.b16 %v824
    %v1000 = vunpack.c.l.b16 %v825
    %v1001 = vunpack.c.h.b16 %v825
    %v1002 = vunpack.c.l.b16 %v826
    %v1003 = vunpack.c.h.b16 %v826
    %v1004 = vunpack.c.l.b16 %v827
    %v1005 = vunpack.c.l.b16 %v828
    %v1006 = vunpack.c.h.b16 %v828
    %v1007 = vunpack.c.l.b16 %v829
    %v1008 = vunpack.c.h.b16 %v829
    %v1009 = vunpack.c.l.b16 %v830
    %v1010 = vunpack.c.h.b16 %v830
    %v1011 = vunpack.c.l.b16 %v831
    %v1012 = vunpack.c.l.b16 %v832
    %v1013 = vunpack.c.h.b16 %v832
    %v1014 = vunpack.c.l.b16 %v833
    %v1015 = vunpack.c.h.b16 %v833
    %v1016 = vunpack.c.l.b16 %v834
    %v1017 = vunpack.c.h.b16 %v834
    %v1018 = vunpack.c.l.b16 %v835
    %v1019 = vunpack.c.l.b16 %v836
    %v1020 = vunpack.c.h.b16 %v836
    %v1021 = vunpack.c.l.b16 %v837
    %v1022 = vunpack.c.h.b16 %v837
    %v1023 = vunpack.c.l.b16 %v838
    %v1024 = vunpack.c.h.b16 %v838
    %v1025 = vunpack.c.l.b16 %v839
    %v1026 = vunpack.c.l.b16 %v840
    %v1027 = vunpack.c.h.b16 %v840
    %v1028 = vunpack.c.l.b16 %v841
    %v1029 = vunpack.c.h.b16 %v841
    %v1030 = vunpack.c.l.b16 %v842
    %v1031 = vunpack.c.h.b16 %v842
    %v1032 = vunpack.c.l.b16 %v843
    %v1033 = vunpack.c.l.b16 %v844
    %v1034 = vunpack.c.h.b16 %v844
    %v1035 = vunpack.c.l.b16 %v845
    %v1036 = vunpack.c.h.b16 %v845
    %v1037 = vunpack.c.l.b16 %v846
    %v1038 = vunpack.c.h.b16 %v846
    %v1039 = vunpack.c.l.b16 %v847
    %v1040 = vunpack.c.l.b16 %v848
    %v1041 = vunpack.c.h.b16 %v848
    %v1042 = vunpack.c.l.b16 %v849
    %v1043 = vunpack.c.h.b16 %v849
    %v1044 = vunpack.c.l.b16 %v850
    %v1045 = vunpack.c.h.b16 %v850
    %v1046 = vunpack.c.l.b16 %v851
    %v1047 = vunpack.c.l.b16 %v852
    %v1048 = vunpack.c.h.b16 %v852
    %v1049 = vunpack.c.l.b16 %v853
    %v1050 = vunpack.c.h.b16 %v853
    %v1051 = vunpack.c.l.b16 %v854
    %v1052 = vunpack.c.h.b16 %v854
    %v1053 = vunpack.c.l.b16 %v855
    %v1054 = vunpack.c.l.b16 %v856
    %v1055 = vunpack.c.h.b16 %v856
    %v1056 = vunpack.c.l.b16 %v857
    %v1057 = vunpack.c.h.b16 %v857
    %v1058 = vunpack.c.l.b16 %v858
    %v1059 = vunpack.c.h.b16 %v858
    %v1060 = vunpack.c.l.b16 %v859
    %v1061 = vunpack.c.l.b16 %v860
    %v1062 = vunpack.c.h.b16 %v860
    %v1063 = vunpack.c.l.b16 %v861
    %v1064 = vunpack.c.h.b16 %v861
    %v1065 = vunpack.c.l.b16 %v862
    %v1066 = vunpack.c.h.b16 %v862
    %v1067 = vunpack.c.l.b16 %v863
    %v1068 = vunpack.c.l.b16 %v864
    %v1069 = vunpack.c.h.b16 %v864
    %v1070 = vunpack.c.l.b16 %v865
    %v1071 = vunpack.c.h.b16 %v865
    %v1072 = vunpack.c.l.b16 %v866
    %v1073 = vunpack.c.h.b16 %v866
    %v1074 = vunpack.c.l.b16 %v867
    %v1075 = vunpack.c.l.b16 %v868
    %v1076 = vunpack.c.h.b16 %v868
    %v1077 = vunpack.c.l.b16 %v869
    %v1078 = vunpack.c.h.b16 %v869
    %v1079 = vunpack.c.l.b16 %v870
    %v1080 = vunpack.c.h.b16 %v870
    %v1081 = vunpack.c.l.b16 %v871
    %v1082 = vunpack.c.l.b16 %v872
    %v1083 = vunpack.c.h.b16 %v872
    %v1084 = vunpack.c.l.b16 %v873
    %v1085 = vunpack.c.h.b16 %v873
    %v1086 = vunpack.c.l.b16 %v874
    %v1087 = vunpack.c.h.b16 %v874
    %v1088 = vunpack.c.l.b16 %v875
    %v1089 = vpack.c.b16 %v984, %v977
    %v1090 = vpack.c.b16 %v985, %v978
    %v1091 = vpack.c.b16 %v986, %v979
    %v1092 = vpack.c.b16 %v987, %v980
    %v1093 = vpack.c.b16 %v988, %v981
    %v1094 = vpack.c.b16 %v989, %v982
    %v1095 = vpack.c.b16 %v990, %v983
    %v1096 = vpack.c.b16 %v998, %v991
    %v1097 = vpack.c.b16 %v999, %v992
    %v1098 = vpack.c.b16 %v1000, %v993
    %v1099 = vpack.c.b16 %v1001, %v994
    %v1100 = vpack.c.b16 %v1002, %v995
    %v1101 = vpack.c.b16 %v1003, %v996
    %v1102 = vpack.c.b16 %v1004, %v997
    %v1103 = vpack.c.b16 %v1012, %v1005
    %v1104 = vpack.c.b16 %v1013, %v1006
    %v1105 = vpack.c.b16 %v1014, %v1007
    %v1106 = vpack.c.b16 %v1015, %v1008
    %v1107 = vpack.c.b16 %v1016, %v1009
    %v1108 = vpack.c.b16 %v1017, %v1010
    %v1109 = vpack.c.b16 %v1018, %v1011
    %v1110 = vpack.c.b16 %v1026, %v1019
    %v1111 = vpack.c.b16 %v1027, %v1020
    %v1112 = vpack.c.b16 %v1028, %v1021
    %v1113 = vpack.c.b16 %v1029, %v1022
    %v1114 = vpack.c.b16 %v1030, %v1023
    %v1115 = vpack.c.b16 %v1031, %v1024
    %v1116 = vpack.c.b16 %v1032, %v1025
    %v1117 = vpack.c.b16 %v1040, %v1033
    %v1118 = vpack.c.b16 %v1041, %v1034
    %v1119 = vpack.c.b16 %v1042, %v1035
    %v1120 = vpack.c.b16 %v1043, %v1036
    %v1121 = vpack.c.b16 %v1044, %v1037
    %v1122 = vpack.c.b16 %v1045, %v1038
    %v1123 = vpack.c.b16 %v1046, %v1039
    %v1124 = vpack.c.b16 %v1054, %v1047
    %v1125 = vpack.c.b16 %v1055, %v1048
    %v1126 = vpack.c.b16 %v1056, %v1049
    %v1127 = vpack.c.b16 %v1057, %v1050
    %v1128 = vpack.c.b16 %v1058, %v1051
    %v1129 = vpack.c.b16 %v1059, %v1052
    %v1130 = vpack.c.b16 %v1060, %v1053
    %v1131 = vpack.c.b16 %v1068, %v1061
    %v1132 = vpack.c.b16 %v1069, %v1062
    %v1133 = vpack.c.b16 %v1070, %v1063
    %v1134 = vpack.c.b16 %v1071, %v1064
    %v1135 = vpack.c.b16 %v1072, %v1065
    %v1136 = vpack.c.b16 %v1073, %v1066
    %v1137 = vpack.c.b16 %v1074, %v1067
    %v1138 = vpack.c.b16 %v1082, %v1075
    %v1139 = vpack.c.b16 %v1083, %v1076
    %v1140 = vpack.c.b16 %v1084, %v1077
    %v1141 = vpack.c.b16 %v1085, %v1078
    %v1142 = vpack.c.b16 %v1086, %v1079
    %v1143 = vpack.c.b16 %v1087, %v1080
    %v1144 = vpack.c.b16 %v1088, %v1081
    %1201 = vmatprep.subr.bf16.mxu0 %v1139
    %1202 = vmatpush1.bf16.msra.mxu0 %v1138
    %1203 = vmatprep.subr.bf16.mxu0 %v1132
    %1204 = vmatpush1.bf16.msra.mxu0 %v1131
    %1205 = vmatprep.subr.bf16.mxu0 %v1125
    %1206 = vmatpush1.bf16.msra.mxu0 %v1124
    %1207 = vmatprep.subr.bf16.mxu0 %v1118
    %1208 = vmatpush1.bf16.msra.mxu0 %v1117
    %1209 = vmatprep.subr.bf16.mxu0 %v1111
    %1210 = vmatpush1.bf16.msra.mxu0 %v1110
    %1211 = vmatprep.subr.bf16.mxu0 %v1104
    %1212 = vmatpush1.bf16.msra.mxu0 %v1103
    %1213 = vmatprep.subr.bf16.mxu0 %v1097
    %1214 = vmatpush1.bf16.msra.mxu0 %v1096
    %1215 = vmatprep.subr.bf16.mxu0 %v1090
    %1216 = vmatpush1.bf16.msra.mxu0 %v1089
    %1217 = vmatprep.subr.bf16.mxu0 0
    %1218 = vmatpush2.bf16.msra.mxu0 0
    %1219 = vmatprep.subr.bf16.mxu0 0
    %1220 = vmatpush2.bf16.msra.mxu0 0
    %1221 = vmatprep.subr.bf16.mxu0 0
    %1222 = vmatpush2.bf16.msra.mxu0 0
    %1223 = vmatprep.subr.bf16.mxu0 0
    %1224 = vmatpush2.bf16.msra.mxu0 0
    %1225 = vmatprep.subr.bf16.mxu0 0
    %1226 = vmatpush2.bf16.msra.mxu0 0
    %1227 = vmatprep.subr.bf16.mxu0 0
    %1228 = vmatpush2.bf16.msra.mxu0 0
    %1229 = vmatprep.subr.bf16.mxu0 0
    %1230 = vmatpush2.bf16.msra.mxu0 0
    %1231 = vmatprep.subr.bf16.mxu0 0
    %1232 = vmatpush2.bf16.msra.mxu0 0
    %1233 = vmatprep.mubr.bf16.mxu0 0
    %1234 = vmatmul.mubr.bf16.gmra.mxu0 %v811
    %v1235 = vpop.f32.mrf.mxu0
    %v1236 = vadd.f32 %v881, %v1235
    %v1237 = vpop.f32.mrf.mxu0
    %v1238 = vadd.f32 %v885, %v1237
    %v1239 = vpop.f32.mrf.mxu0
    %v1240 = vpop.f32.mrf.mxu0
    %1241 = vdwg.mxu0
    %1242 = vmatprep.subr.bf16.mxu0 %v1141
    %1243 = vmatpush1.bf16.msra.mxu0 %v1140
    %1244 = vmatprep.subr.bf16.mxu0 %v1134
    %1245 = vmatpush1.bf16.msra.mxu0 %v1133
    %1246 = vmatprep.subr.bf16.mxu0 %v1127
    %1247 = vmatpush1.bf16.msra.mxu0 %v1126
    %1248 = vmatprep.subr.bf16.mxu0 %v1120
    %1249 = vmatpush1.bf16.msra.mxu0 %v1119
    %1250 = vmatprep.subr.bf16.mxu0 %v1113
    %1251 = vmatpush1.bf16.msra.mxu0 %v1112
    %1252 = vmatprep.subr.bf16.mxu0 %v1106
    %1253 = vmatpush1.bf16.msra.mxu0 %v1105
    %1254 = vmatprep.subr.bf16.mxu0 %v1099
    %1255 = vmatpush1.bf16.msra.mxu0 %v1098
    %1256 = vmatprep.subr.bf16.mxu0 %v1092
    %1257 = vmatpush1.bf16.msra.mxu0 %v1091
    %1258 = vmatprep.subr.bf16.mxu0 0
    %1259 = vmatpush2.bf16.msra.mxu0 0
    %1260 = vmatprep.subr.bf16.mxu0 0
    %1261 = vmatpush2.bf16.msra.mxu0 0
    %1262 = vmatprep.subr.bf16.mxu0 0
    %1263 = vmatpush2.bf16.msra.mxu0 0
    %1264 = vmatprep.subr.bf16.mxu0 0
    %1265 = vmatpush2.bf16.msra.mxu0 0
    %1266 = vmatprep.subr.bf16.mxu0 0
    %1267 = vmatpush2.bf16.msra.mxu0 0
    %1268 = vmatprep.subr.bf16.mxu0 0
    %1269 = vmatpush2.bf16.msra.mxu0 0
    %1270 = vmatprep.subr.bf16.mxu0 0
    %1271 = vmatpush2.bf16.msra.mxu0 0
    %1272 = vmatprep.subr.bf16.mxu0 0
    %1273 = vmatpush2.bf16.msra.mxu0 0
    %1274 = vmatprep.mubr.bf16.mxu0 0
    %1275 = vmatmul.mubr.bf16.gmra.mxu0 %v811
    %v1276 = vpop.f32.mrf.mxu0
    %v1277 = vadd.f32 %v889, %v1276
    %v1278 = vpop.f32.mrf.mxu0
    %v1279 = vadd.f32 %v893, %v1278
    %v1280 = vpop.f32.mrf.mxu0
    %v1281 = vpop.f32.mrf.mxu0
    %1282 = vdwg.mxu0
    %1283 = vmatprep.subr.bf16.mxu0 %v1143
    %1284 = vmatpush1.bf16.msra.mxu0 %v1142
    %1285 = vmatprep.subr.bf16.mxu0 %v1136
    %1286 = vmatpush1.bf16.msra.mxu0 %v1135
    %1287 = vmatprep.subr.bf16.mxu0 %v1129
    %1288 = vmatpush1.bf16.msra.mxu0 %v1128
    %1289 = vmatprep.subr.bf16.mxu0 %v1122
    %1290 = vmatpush1.bf16.msra.mxu0 %v1121
    %1291 = vmatprep.subr.bf16.mxu0 %v1115
    %1292 = vmatpush1.bf16.msra.mxu0 %v1114
    %1293 = vmatprep.subr.bf16.mxu0 %v1108
    %1294 = vmatpush1.bf16.msra.mxu0 %v1107
    %1295 = vmatprep.subr.bf16.mxu0 %v1101
    %1296 = vmatpush1.bf16.msra.mxu0 %v1100
    %1297 = vmatprep.subr.bf16.mxu0 %v1094
    %1298 = vmatpush1.bf16.msra.mxu0 %v1093
    %1299 = vmatprep.subr.bf16.mxu0 0
    %1300 = vmatpush2.bf16.msra.mxu0 0
    %1301 = vmatprep.subr.bf16.mxu0 0
    %1302 = vmatpush2.bf16.msra.mxu0 0
    %1303 = vmatprep.subr.bf16.mxu0 0
    %1304 = vmatpush2.bf16.msra.mxu0 0
    %1305 = vmatprep.subr.bf16.mxu0 0
    %1306 = vmatpush2.bf16.msra.mxu0 0
    %1307 = vmatprep.subr.bf16.mxu0 0
    %1308 = vmatpush2.bf16.msra.mxu0 0
    %1309 = vmatprep.subr.bf16.mxu0 0
    %1310 = vmatpush2.bf16.msra.mxu0 0
    %1311 = vmatprep.subr.bf16.mxu0 0
    %1312 = vmatpush2.bf16.msra.mxu0 0
    %1313 = vmatprep.subr.bf16.mxu0 0
    %1314 = vmatpush2.bf16.msra.mxu0 0
    %1315 = vmatprep.mubr.bf16.mxu0 0
    %1316 = vmatmul.mubr.bf16.gmra.mxu0 %v811
    %v1317 = vpop.f32.mrf.mxu0
    %v1318 = vadd.f32 %v897, %v1317
    %v1319 = vpop.f32.mrf.mxu0
    %v1320 = vadd.f32 %v901, %v1319
    %v1321 = vpop.f32.mrf.mxu0
    %v1322 = vpop.f32.mrf.mxu0
    %1323 = vdwg.mxu0
    %1324 = vmatprep.subr.bf16.mxu0 0
    %1325 = vmatpush1.bf16.msra.mxu0 %v1144
    %1326 = vmatprep.subr.bf16.mxu0 0
    %1327 = vmatpush1.bf16.msra.mxu0 %v1137
    %1328 = vmatprep.subr.bf16.mxu0 0
    %1329 = vmatpush1.bf16.msra.mxu0 %v1130
    %1330 = vmatprep.subr.bf16.mxu0 0
    %1331 = vmatpush1.bf16.msra.mxu0 %v1123
    %1332 = vmatprep.subr.bf16.mxu0 0
    %1333 = vmatpush1.bf16.msra.mxu0 %v1116
    %1334 = vmatprep.subr.bf16.mxu0 0
    %1335 = vmatpush1.bf16.msra.mxu0 %v1109
    %1336 = vmatprep.subr.bf16.mxu0 0
    %1337 = vmatpush1.bf16.msra.mxu0 %v1102
    %1338 = vmatprep.subr.bf16.mxu0 0
    %1339 = vmatpush1.bf16.msra.mxu0 %v1095
    %1340 = vmatprep.subr.bf16.mxu0 0
    %1341 = vmatpush2.bf16.msra.mxu0 0
    %1342 = vmatprep.subr.bf16.mxu0 0
    %1343 = vmatpush2.bf16.msra.mxu0 0
    %1344 = vmatprep.subr.bf16.mxu0 0
    %1345 = vmatpush2.bf16.msra.mxu0 0
    %1346 = vmatprep.subr.bf16.mxu0 0
    %1347 = vmatpush2.bf16.msra.mxu0 0
    %1348 = vmatprep.subr.bf16.mxu0 0
    %1349 = vmatpush2.bf16.msra.mxu0 0
    %1350 = vmatprep.subr.bf16.mxu0 0
    %1351 = vmatpush2.bf16.msra.mxu0 0
    %1352 = vmatprep.subr.bf16.mxu0 0
    %1353 = vmatpush2.bf16.msra.mxu0 0
    %1354 = vmatprep.subr.bf16.mxu0 0
    %1355 = vmatpush2.bf16.msra.mxu0 0
    %1356 = vmatprep.mubr.bf16.mxu0 0
    %1357 = vmatmul.mubr.bf16.gmra.mxu0 %v811
    %v1358 = vpop.f32.mrf.mxu0
    %v1359 = vadd.f32 %v905, %v1358
    %v1360 = vpop.f32.mrf.mxu0
    %v1361 = vpop.f32.mrf.mxu0
    %v1362 = vpop.f32.mrf.mxu0
    %1363 = vdwg.mxu0
    %1364 = vst [vmem:[%s5] sm:$0xff] %v1236
    %1365 = vst [vmem:[%s5 + $0x8] sm:$0xff] %v1238
    %1366 = vst [vmem:[%s5 + $0x10] sm:$0xff] %v1277
    %1367 = vst [vmem:[%s5 + $0x18] sm:$0xff] %v1279
    %1368 = vst [vmem:[%s5 + $0x20] sm:$0xff] %v1318
    %1369 = vst [vmem:[%s5 + $0x28] sm:$0xff] %v1320
    %1370 = vst [vmem:[%s5 + $0x30] sm:$0xff] %v1359
    // Predicated region
    $region34: #{_se_forward_2d.2} parent=1 // pred_check
      _
    $region35: #{_se_forward_2d.2} parent=1 // pred_check_branch
      %1372 = sbr.rel (0) target = $region37
    $region36: #{_se_forward_2d.2} parent=1 // pred_region
      _
    $region37: #{_se_forward_2d.2} parent=1 // pred_fallthru
      _
    // Predicated region
    $region38: #{_se_forward_2d.2} parent=1 // pred_check
      _
    $region39: #{_se_forward_2d.2} parent=1 // pred_check_branch
      %1374 = sbr.rel (0) target = $region41
    $region40: #{_se_forward_2d.2} parent=1 // pred_region
      _
    $region41: #{_se_forward_2d.2} parent=1 // pred_fallthru
      _
    %1375 = vsyncpa [#allocation8], 1
    %1376 = vsyncpa [#allocation10], 1
    %1377 = vsyncpa [#allocation13], 1

</llo_original>
